<compile_context>
chip_gen: v5e
topology: v5e:2x2
jax: 0.10.0
libtpu: 0.0.40
codegen_flags: <defaults>
</compile_context>

<pallas_src>
import functools

import numpy as np

import jax
import jax.numpy as jnp
from jax.experimental import pallas as pl
from jax.experimental.pallas import tpu as pltpu

EPS = 1e-5  # nn.BatchNorm2d default eps


def _basic_block_kernel(x_ref, w1_ref, w2_ref, s1_ref, b1_ref, s2_ref, b2_ref,
                        mask_ref, out_ref, *, H, W):
  """conv1+bn1+relu+conv2+bn2+identity+relu on a (N*C, H*W) lane-dense slab."""
  HW = H * W
  x = x_ref[...]                                        # (R, HW) f32, R = N*C

  def conv3x3(src, w_taps_ref):
    """9-tap shift-and-matmul conv; each shifted slab is built once."""
    acc = None
    t = 0
    for dh in (-1, 0, 1):
      for dw in (-1, 0, 1):
        s = dh * W + dw                                 # flat spatial offset
        if s == 0:
          shifted = src
        else:
          # want shifted[p] == src[p + s]; pltpu.roll follows jnp.roll
          # semantics (result[i] = x[i - shift]), so shift by -s (mod HW).
          shifted = pltpu.roll(src, (-s) % HW, axis=1)
        if dh == 0 and dw == 0:
          tap = shifted                                 # center tap: no mask
        else:
          tap = shifted * mask_ref[t]                   # zero-pad boundary mask
        # (R, R) block-diag weights @ (R, HW) slab on the MXU, f32 accumulate.
        contrib = jnp.dot(w_taps_ref[t], tap,
                          preferred_element_type=jnp.float32)
        acc = contrib if acc is None else acc + contrib
        t += 1
    return acc

  y = conv3x3(x, w1_ref)
  y = jnp.maximum(y * s1_ref[...] + b1_ref[...], 0.0)   # bn1 + relu
  y = conv3x3(y, w2_ref)
  y = y * s2_ref[...] + b2_ref[...] + x                 # bn2 + identity add
  out_ref[...] = jnp.maximum(y, 0.0)                    # final relu


def _fold_bn(gamma, beta, mean, var):
  s = gamma / jnp.sqrt(var + EPS)
  return s.astype(jnp.float32), (beta - mean * s).astype(jnp.float32)


def _block_diag_taps(w, n_batch):
  """(C, C, 3, 3) OIHW weights -> (9, N*C, N*C) per-tap batch-block-diag."""
  C = w.shape[0]
  w_taps = jnp.transpose(w.reshape(C, C, 9), (2, 0, 1))  # (9, co, ci), t=kh*3+kw
  eye_n = jnp.eye(n_batch, dtype=jnp.float32)
  bd = jnp.einsum("toi,nm->tnomi", w_taps.astype(jnp.float32), eye_n)
  return bd.reshape(9, n_batch * C, n_batch * C)


def _tap_masks(H, W):
  """(9, 1, H*W) f32 validity masks implementing the pad=1 zero padding."""
  hh = np.repeat(np.arange(H), W)
  ww = np.tile(np.arange(W), H)
  masks = []
  for dh in (-1, 0, 1):
    for dw in (-1, 0, 1):
      ok = ((hh + dh >= 0) & (hh + dh < H) &
            (ww + dw >= 0) & (ww + dw < W))
      masks.append(ok.astype(np.float32))
  return jnp.asarray(np.stack(masks)[:, None, :])


def basic_block(x, w1, bn1, w2, bn2):
  """x: (N, C, H, W) f32; w*: (C, C, 3, 3); bn* = (gamma, beta, mean, var)."""
  # TODO(synk): stride>1 / downsample path not implemented (module defaults:
  # stride=1, downsample=None); BN uses inference-mode running statistics.
  N, C, H, W = x.shape
  R, HW = N * C, H * W

  s1, b1 = _fold_bn(*bn1)
  s2, b2 = _fold_bn(*bn2)
  s1r = jnp.tile(s1, N).reshape(R, 1)
  b1r = jnp.tile(b1, N).reshape(R, 1)
  s2r = jnp.tile(s2, N).reshape(R, 1)
  b2r = jnp.tile(b2, N).reshape(R, 1)

  x_flat = x.reshape(R, HW).astype(jnp.float32)          # lane-dense layout
  w1_bd = _block_diag_taps(w1, N)
  w2_bd = _block_diag_taps(w2, N)
  masks = _tap_masks(H, W)

  kernel = functools.partial(_basic_block_kernel, H=H, W=W)
  vmem = pl.BlockSpec(memory_space=pltpu.MemorySpace.VMEM)

  out_flat = pl.pallas_call(
      kernel,
      out_shape=jax.ShapeDtypeStruct((R, HW), jnp.float32),
      in_specs=[vmem] * 8,
      out_specs=vmem,
  )(x_flat, w1_bd, w2_bd, s1r, b1r, s2r, b2r, masks)

  return out_flat.reshape(N, C, H, W)


def _ref_basic_block(x, w1, bn1, w2, bn2):
  """Pure-JAX reference matching the PyTorch forward (inference-mode BN)."""
  def conv(a, w):
    return jax.lax.conv_general_dilated(
        a, w, window_strides=(1, 1), padding=((1, 1), (1, 1)),
        dimension_numbers=("NCHW", "OIHW", "NCHW"),
        precision=jax.lax.Precision.HIGHEST)

  def bn(a, p):
    g, b, m, v = p
    return ((a - m[None, :, None, None])
            / jnp.sqrt(v[None, :, None, None] + EPS)
            * g[None, :, None, None] + b[None, :, None, None])

  out = jax.nn.relu(bn(conv(x, w1), bn1))
  out = bn(conv(out, w2), bn2) + x
  return jax.nn.relu(out)


if __name__ == "__main__":
  N, C, H, W = 2, 4, 16, 16
  key = jax.random.PRNGKey(0)
  keys = jax.random.split(key, 11)

  x = jax.random.normal(keys[0], (N, C, H, W), jnp.float32)
  w1 = 0.1 * jax.random.normal(keys[1], (C, C, 3, 3), jnp.float32)
  w2 = 0.1 * jax.random.normal(keys[2], (C, C, 3, 3), jnp.float32)
  bn1 = (1.0 + 0.1 * jax.random.normal(keys[3], (C,), jnp.float32),   # gamma
         0.1 * jax.random.normal(keys[4], (C,), jnp.float32),         # beta
         0.1 * jax.random.normal(keys[5], (C,), jnp.float32),         # mean
         1.0 + 0.5 * jax.random.uniform(keys[6], (C,), jnp.float32))  # var
  bn2 = (1.0 + 0.1 * jax.random.normal(keys[7], (C,), jnp.float32),
         0.1 * jax.random.normal(keys[8], (C,), jnp.float32),
         0.1 * jax.random.normal(keys[9], (C,), jnp.float32),
         1.0 + 0.5 * jax.random.uniform(keys[10], (C,), jnp.float32))

  out = jax.block_until_ready(basic_block(x, w1, bn1, w2, bn2))
  ref = _ref_basic_block(x, w1, bn1, w2, bn2)

  assert out.shape == (N, C, H, W)
  # Tolerance 1e-3: kernel accumulates the conv on the MXU (f32 accumulate),
  # which may differ in the last bits from the XLA conv reference.
  err = jnp.max(jnp.abs(out - ref))
  assert jnp.allclose(out, ref, rtol=1e-3, atol=1e-3), f"max abs err = {err}"

  print("KERNEL_OK")
</pallas_src>

<mosaic_0001>
module attributes {stable_mosaic.version = 11 : i64} {
  func.func @_basic_block_kernel(%arg0: memref<8x256xf32, #tpu.memory_space<vmem>>, %arg1: memref<9x8x8xf32, #tpu.memory_space<vmem>>, %arg2: memref<9x8x8xf32, #tpu.memory_space<vmem>>, %arg3: memref<8x1xf32, #tpu.memory_space<vmem>>, %arg4: memref<8x1xf32, #tpu.memory_space<vmem>>, %arg5: memref<8x1xf32, #tpu.memory_space<vmem>>, %arg6: memref<8x1xf32, #tpu.memory_space<vmem>>, %arg7: memref<9x1x256xf32, #tpu.memory_space<vmem>>, %arg8: memref<8x256xf32, #tpu.memory_space<vmem>>) attributes {dimension_semantics = [], scalar_prefetch = 0 : i64, scratch_operands = 0 : i64, tpu.core_type = #tpu.core_type<tc>} {
    %c0 = arith.constant 0 : index
    %c0_0 = arith.constant 0 : index
    %0 = vector.load %arg0[%c0, %c0_0] : memref<8x256xf32, #tpu.memory_space<vmem>>, vector<8x256xf32>
    %c17_i32 = arith.constant 17 : i32
    %1 = tpu.dynamic_rotate %0 by %c17_i32 dim 1 : vector<8x256xf32>, i32 -> vector<8x256xf32>
    %c0_1 = arith.constant 0 : index
    %c0_2 = arith.constant 0 : index
    %c0_3 = arith.constant 0 : index
    %2 = vector.load %arg7[%c0_1, %c0_2, %c0_3] : memref<9x1x256xf32, #tpu.memory_space<vmem>>, vector<1x1x256xf32>
    %3 = vector.shape_cast %2 : vector<1x1x256xf32> to vector<1x256xf32>
    %4 = vector.broadcast %3 : vector<1x256xf32> to vector<8x256xf32>
    %5 = arith.mulf %1, %4 : vector<8x256xf32>
    %c0_4 = arith.constant 0 : index
    %c0_5 = arith.constant 0 : index
    %c0_6 = arith.constant 0 : index
    %6 = vector.load %arg1[%c0_4, %c0_5, %c0_6] : memref<9x8x8xf32, #tpu.memory_space<vmem>>, vector<1x8x8xf32>
    %7 = vector.shape_cast %6 : vector<1x8x8xf32> to vector<8x8xf32>
    %cst = arith.constant dense<0.000000e+00> : vector<8x256xf32>
    %8 = tpu.matmul %7, %5, %cst {dimension_numbers = #tpu.dot_dimension_numbers<[1], [0], [0], [1], [0, 0, 1, 1], [], []>} : vector<8x8xf32>, vector<8x256xf32>, vector<8x256xf32> -> vector<8x256xf32>
    %c16_i32 = arith.constant 16 : i32
    %9 = tpu.dynamic_rotate %0 by %c16_i32 dim 1 : vector<8x256xf32>, i32 -> vector<8x256xf32>
    %c1 = arith.constant 1 : index
    %c0_7 = arith.constant 0 : index
    %c0_8 = arith.constant 0 : index
    %10 = vector.load %arg7[%c1, %c0_7, %c0_8] : memref<9x1x256xf32, #tpu.memory_space<vmem>>, vector<1x1x256xf32>
    %11 = vector.shape_cast %10 : vector<1x1x256xf32> to vector<1x256xf32>
    %12 = vector.broadcast %11 : vector<1x256xf32> to vector<8x256xf32>
    %13 = arith.mulf %9, %12 : vector<8x256xf32>
    %c1_9 = arith.constant 1 : index
    %c0_10 = arith.constant 0 : index
    %c0_11 = arith.constant 0 : index
    %14 = vector.load %arg1[%c1_9, %c0_10, %c0_11] : memref<9x8x8xf32, #tpu.memory_space<vmem>>, vector<1x8x8xf32>
    %15 = vector.shape_cast %14 : vector<1x8x8xf32> to vector<8x8xf32>
    %cst_12 = arith.constant dense<0.000000e+00> : vector<8x256xf32>
    %16 = tpu.matmul %15, %13, %cst_12 {dimension_numbers = #tpu.dot_dimension_numbers<[1], [0], [0], [1], [0, 0, 1, 1], [], []>} : vector<8x8xf32>, vector<8x256xf32>, vector<8x256xf32> -> vector<8x256xf32>
    %17 = arith.addf %8, %16 : vector<8x256xf32>
    %c15_i32 = arith.constant 15 : i32
    %18 = tpu.dynamic_rotate %0 by %c15_i32 dim 1 : vector<8x256xf32>, i32 -> vector<8x256xf32>
    %c2 = arith.constant 2 : index
    %c0_13 = arith.constant 0 : index
    %c0_14 = arith.constant 0 : index
    %19 = vector.load %arg7[%c2, %c0_13, %c0_14] : memref<9x1x256xf32, #tpu.memory_space<vmem>>, vector<1x1x256xf32>
    %20 = vector.shape_cast %19 : vector<1x1x256xf32> to vector<1x256xf32>
    %21 = vector.broadcast %20 : vector<1x256xf32> to vector<8x256xf32>
    %22 = arith.mulf %18, %21 : vector<8x256xf32>
    %c2_15 = arith.constant 2 : index
    %c0_16 = arith.constant 0 : index
    %c0_17 = arith.constant 0 : index
    %23 = vector.load %arg1[%c2_15, %c0_16, %c0_17] : memref<9x8x8xf32, #tpu.memory_space<vmem>>, vector<1x8x8xf32>
    %24 = vector.shape_cast %23 : vector<1x8x8xf32> to vector<8x8xf32>
    %cst_18 = arith.constant dense<0.000000e+00> : vector<8x256xf32>
    %25 = tpu.matmul %24, %22, %cst_18 {dimension_numbers = #tpu.dot_dimension_numbers<[1], [0], [0], [1], [0, 0, 1, 1], [], []>} : vector<8x8xf32>, vector<8x256xf32>, vector<8x256xf32> -> vector<8x256xf32>
    %26 = arith.addf %17, %25 : vector<8x256xf32>
    %c1_i32 = arith.constant 1 : i32
    %27 = tpu.dynamic_rotate %0 by %c1_i32 dim 1 : vector<8x256xf32>, i32 -> vector<8x256xf32>
    %c3 = arith.constant 3 : index
    %c0_19 = arith.constant 0 : index
    %c0_20 = arith.constant 0 : index
    %28 = vector.load %arg7[%c3, %c0_19, %c0_20] : memref<9x1x256xf32, #tpu.memory_space<vmem>>, vector<1x1x256xf32>
    %29 = vector.shape_cast %28 : vector<1x1x256xf32> to vector<1x256xf32>
    %30 = vector.broadcast %29 : vector<1x256xf32> to vector<8x256xf32>
    %31 = arith.mulf %27, %30 : vector<8x256xf32>
    %c3_21 = arith.constant 3 : index
    %c0_22 = arith.constant 0 : index
    %c0_23 = arith.constant 0 : index
    %32 = vector.load %arg1[%c3_21, %c0_22, %c0_23] : memref<9x8x8xf32, #tpu.memory_space<vmem>>, vector<1x8x8xf32>
    %33 = vector.shape_cast %32 : vector<1x8x8xf32> to vector<8x8xf32>
    %cst_24 = arith.constant dense<0.000000e+00> : vector<8x256xf32>
    %34 = tpu.matmul %33, %31, %cst_24 {dimension_numbers = #tpu.dot_dimension_numbers<[1], [0], [0], [1], [0, 0, 1, 1], [], []>} : vector<8x8xf32>, vector<8x256xf32>, vector<8x256xf32> -> vector<8x256xf32>
    %35 = arith.addf %26, %34 : vector<8x256xf32>
    %c4 = arith.constant 4 : index
    %c0_25 = arith.constant 0 : index
    %c0_26 = arith.constant 0 : index
    %36 = vector.load %arg1[%c4, %c0_25, %c0_26] : memref<9x8x8xf32, #tpu.memory_space<vmem>>, vector<1x8x8xf32>
    %37 = vector.shape_cast %36 : vector<1x8x8xf32> to vector<8x8xf32>
    %cst_27 = arith.constant dense<0.000000e+00> : vector<8x256xf32>
    %38 = tpu.matmul %37, %0, %cst_27 {dimension_numbers = #tpu.dot_dimension_numbers<[1], [0], [0], [1], [0, 0, 1, 1], [], []>} : vector<8x8xf32>, vector<8x256xf32>, vector<8x256xf32> -> vector<8x256xf32>
    %39 = arith.addf %35, %38 : vector<8x256xf32>
    %c255_i32 = arith.constant 255 : i32
    %40 = tpu.dynamic_rotate %0 by %c255_i32 dim 1 : vector<8x256xf32>, i32 -> vector<8x256xf32>
    %c5 = arith.constant 5 : index
    %c0_28 = arith.constant 0 : index
    %c0_29 = arith.constant 0 : index
    %41 = vector.load %arg7[%c5, %c0_28, %c0_29] : memref<9x1x256xf32, #tpu.memory_space<vmem>>, vector<1x1x256xf32>
    %42 = vector.shape_cast %41 : vector<1x1x256xf32> to vector<1x256xf32>
    %43 = vector.broadcast %42 : vector<1x256xf32> to vector<8x256xf32>
    %44 = arith.mulf %40, %43 : vector<8x256xf32>
    %c5_30 = arith.constant 5 : index
    %c0_31 = arith.constant 0 : index
    %c0_32 = arith.constant 0 : index
    %45 = vector.load %arg1[%c5_30, %c0_31, %c0_32] : memref<9x8x8xf32, #tpu.memory_space<vmem>>, vector<1x8x8xf32>
    %46 = vector.shape_cast %45 : vector<1x8x8xf32> to vector<8x8xf32>
    %cst_33 = arith.constant dense<0.000000e+00> : vector<8x256xf32>
    %47 = tpu.matmul %46, %44, %cst_33 {dimension_numbers = #tpu.dot_dimension_numbers<[1], [0], [0], [1], [0, 0, 1, 1], [], []>} : vector<8x8xf32>, vector<8x256xf32>, vector<8x256xf32> -> vector<8x256xf32>
    %48 = arith.addf %39, %47 : vector<8x256xf32>
    %c241_i32 = arith.constant 241 : i32
    %49 = tpu.dynamic_rotate %0 by %c241_i32 dim 1 : vector<8x256xf32>, i32 -> vector<8x256xf32>
    %c6 = arith.constant 6 : index
    %c0_34 = arith.constant 0 : index
    %c0_35 = arith.constant 0 : index
    %50 = vector.load %arg7[%c6, %c0_34, %c0_35] : memref<9x1x256xf32, #tpu.memory_space<vmem>>, vector<1x1x256xf32>
    %51 = vector.shape_cast %50 : vector<1x1x256xf32> to vector<1x256xf32>
    %52 = vector.broadcast %51 : vector<1x256xf32> to vector<8x256xf32>
    %53 = arith.mulf %49, %52 : vector<8x256xf32>
    %c6_36 = arith.constant 6 : index
    %c0_37 = arith.constant 0 : index
    %c0_38 = arith.constant 0 : index
    %54 = vector.load %arg1[%c6_36, %c0_37, %c0_38] : memref<9x8x8xf32, #tpu.memory_space<vmem>>, vector<1x8x8xf32>
    %55 = vector.shape_cast %54 : vector<1x8x8xf32> to vector<8x8xf32>
    %cst_39 = arith.constant dense<0.000000e+00> : vector<8x256xf32>
    %56 = tpu.matmul %55, %53, %cst_39 {dimension_numbers = #tpu.dot_dimension_numbers<[1], [0], [0], [1], [0, 0, 1, 1], [], []>} : vector<8x8xf32>, vector<8x256xf32>, vector<8x256xf32> -> vector<8x256xf32>
    %57 = arith.addf %48, %56 : vector<8x256xf32>
    %c240_i32 = arith.constant 240 : i32
    %58 = tpu.dynamic_rotate %0 by %c240_i32 dim 1 : vector<8x256xf32>, i32 -> vector<8x256xf32>
    %c7 = arith.constant 7 : index
    %c0_40 = arith.constant 0 : index
    %c0_41 = arith.constant 0 : index
    %59 = vector.load %arg7[%c7, %c0_40, %c0_41] : memref<9x1x256xf32, #tpu.memory_space<vmem>>, vector<1x1x256xf32>
    %60 = vector.shape_cast %59 : vector<1x1x256xf32> to vector<1x256xf32>
    %61 = vector.broadcast %60 : vector<1x256xf32> to vector<8x256xf32>
    %62 = arith.mulf %58, %61 : vector<8x256xf32>
    %c7_42 = arith.constant 7 : index
    %c0_43 = arith.constant 0 : index
    %c0_44 = arith.constant 0 : index
    %63 = vector.load %arg1[%c7_42, %c0_43, %c0_44] : memref<9x8x8xf32, #tpu.memory_space<vmem>>, vector<1x8x8xf32>
    %64 = vector.shape_cast %63 : vector<1x8x8xf32> to vector<8x8xf32>
    %cst_45 = arith.constant dense<0.000000e+00> : vector<8x256xf32>
    %65 = tpu.matmul %64, %62, %cst_45 {dimension_numbers = #tpu.dot_dimension_numbers<[1], [0], [0], [1], [0, 0, 1, 1], [], []>} : vector<8x8xf32>, vector<8x256xf32>, vector<8x256xf32> -> vector<8x256xf32>
    %66 = arith.addf %57, %65 : vector<8x256xf32>
    %c239_i32 = arith.constant 239 : i32
    %67 = tpu.dynamic_rotate %0 by %c239_i32 dim 1 : vector<8x256xf32>, i32 -> vector<8x256xf32>
    %c8 = arith.constant 8 : index
    %c0_46 = arith.constant 0 : index
    %c0_47 = arith.constant 0 : index
    %68 = vector.load %arg7[%c8, %c0_46, %c0_47] : memref<9x1x256xf32, #tpu.memory_space<vmem>>, vector<1x1x256xf32>
    %69 = vector.shape_cast %68 : vector<1x1x256xf32> to vector<1x256xf32>
    %70 = vector.broadcast %69 : vector<1x256xf32> to vector<8x256xf32>
    %71 = arith.mulf %67, %70 : vector<8x256xf32>
    %c8_48 = arith.constant 8 : index
    %c0_49 = arith.constant 0 : index
    %c0_50 = arith.constant 0 : index
    %72 = vector.load %arg1[%c8_48, %c0_49, %c0_50] : memref<9x8x8xf32, #tpu.memory_space<vmem>>, vector<1x8x8xf32>
    %73 = vector.shape_cast %72 : vector<1x8x8xf32> to vector<8x8xf32>
    %cst_51 = arith.constant dense<0.000000e+00> : vector<8x256xf32>
    %74 = tpu.matmul %73, %71, %cst_51 {dimension_numbers = #tpu.dot_dimension_numbers<[1], [0], [0], [1], [0, 0, 1, 1], [], []>} : vector<8x8xf32>, vector<8x256xf32>, vector<8x256xf32> -> vector<8x256xf32>
    %75 = arith.addf %66, %74 : vector<8x256xf32>
    %c0_52 = arith.constant 0 : index
    %c0_53 = arith.constant 0 : index
    %76 = vector.load %arg3[%c0_52, %c0_53] : memref<8x1xf32, #tpu.memory_space<vmem>>, vector<8x1xf32>
    %77 = vector.broadcast %76 : vector<8x1xf32> to vector<8x256xf32>
    %78 = arith.mulf %75, %77 : vector<8x256xf32>
    %c0_54 = arith.constant 0 : index
    %c0_55 = arith.constant 0 : index
    %79 = vector.load %arg4[%c0_54, %c0_55] : memref<8x1xf32, #tpu.memory_space<vmem>>, vector<8x1xf32>
    %80 = vector.broadcast %79 : vector<8x1xf32> to vector<8x256xf32>
    %81 = arith.addf %78, %80 : vector<8x256xf32>
    %cst_56 = arith.constant 0.000000e+00 : f32
    %82 = vector.broadcast %cst_56 : f32 to vector<8x256xf32>
    %83 = arith.maximumf %81, %82 : vector<8x256xf32>
    %c17_i32_57 = arith.constant 17 : i32
    %84 = tpu.dynamic_rotate %83 by %c17_i32_57 dim 1 : vector<8x256xf32>, i32 -> vector<8x256xf32>
    %c0_58 = arith.constant 0 : index
    %c0_59 = arith.constant 0 : index
    %c0_60 = arith.constant 0 : index
    %85 = vector.load %arg7[%c0_58, %c0_59, %c0_60] : memref<9x1x256xf32, #tpu.memory_space<vmem>>, vector<1x1x256xf32>
    %86 = vector.shape_cast %85 : vector<1x1x256xf32> to vector<1x256xf32>
    %87 = vector.broadcast %86 : vector<1x256xf32> to vector<8x256xf32>
    %88 = arith.mulf %84, %87 : vector<8x256xf32>
    %c0_61 = arith.constant 0 : index
    %c0_62 = arith.constant 0 : index
    %c0_63 = arith.constant 0 : index
    %89 = vector.load %arg2[%c0_61, %c0_62, %c0_63] : memref<9x8x8xf32, #tpu.memory_space<vmem>>, vector<1x8x8xf32>
    %90 = vector.shape_cast %89 : vector<1x8x8xf32> to vector<8x8xf32>
    %cst_64 = arith.constant dense<0.000000e+00> : vector<8x256xf32>
    %91 = tpu.matmul %90, %88, %cst_64 {dimension_numbers = #tpu.dot_dimension_numbers<[1], [0], [0], [1], [0, 0, 1, 1], [], []>} : vector<8x8xf32>, vector<8x256xf32>, vector<8x256xf32> -> vector<8x256xf32>
    %c16_i32_65 = arith.constant 16 : i32
    %92 = tpu.dynamic_rotate %83 by %c16_i32_65 dim 1 : vector<8x256xf32>, i32 -> vector<8x256xf32>
    %c1_66 = arith.constant 1 : index
    %c0_67 = arith.constant 0 : index
    %c0_68 = arith.constant 0 : index
    %93 = vector.load %arg7[%c1_66, %c0_67, %c0_68] : memref<9x1x256xf32, #tpu.memory_space<vmem>>, vector<1x1x256xf32>
    %94 = vector.shape_cast %93 : vector<1x1x256xf32> to vector<1x256xf32>
    %95 = vector.broadcast %94 : vector<1x256xf32> to vector<8x256xf32>
    %96 = arith.mulf %92, %95 : vector<8x256xf32>
    %c1_69 = arith.constant 1 : index
    %c0_70 = arith.constant 0 : index
    %c0_71 = arith.constant 0 : index
    %97 = vector.load %arg2[%c1_69, %c0_70, %c0_71] : memref<9x8x8xf32, #tpu.memory_space<vmem>>, vector<1x8x8xf32>
    %98 = vector.shape_cast %97 : vector<1x8x8xf32> to vector<8x8xf32>
    %cst_72 = arith.constant dense<0.000000e+00> : vector<8x256xf32>
    %99 = tpu.matmul %98, %96, %cst_72 {dimension_numbers = #tpu.dot_dimension_numbers<[1], [0], [0], [1], [0, 0, 1, 1], [], []>} : vector<8x8xf32>, vector<8x256xf32>, vector<8x256xf32> -> vector<8x256xf32>
    %100 = arith.addf %91, %99 : vector<8x256xf32>
    %c15_i32_73 = arith.constant 15 : i32
    %101 = tpu.dynamic_rotate %83 by %c15_i32_73 dim 1 : vector<8x256xf32>, i32 -> vector<8x256xf32>
    %c2_74 = arith.constant 2 : index
    %c0_75 = arith.constant 0 : index
    %c0_76 = arith.constant 0 : index
    %102 = vector.load %arg7[%c2_74, %c0_75, %c0_76] : memref<9x1x256xf32, #tpu.memory_space<vmem>>, vector<1x1x256xf32>
    %103 = vector.shape_cast %102 : vector<1x1x256xf32> to vector<1x256xf32>
    %104 = vector.broadcast %103 : vector<1x256xf32> to vector<8x256xf32>
    %105 = arith.mulf %101, %104 : vector<8x256xf32>
    %c2_77 = arith.constant 2 : index
    %c0_78 = arith.constant 0 : index
    %c0_79 = arith.constant 0 : index
    %106 = vector.load %arg2[%c2_77, %c0_78, %c0_79] : memref<9x8x8xf32, #tpu.memory_space<vmem>>, vector<1x8x8xf32>
    %107 = vector.shape_cast %106 : vector<1x8x8xf32> to vector<8x8xf32>
    %cst_80 = arith.constant dense<0.000000e+00> : vector<8x256xf32>
    %108 = tpu.matmul %107, %105, %cst_80 {dimension_numbers = #tpu.dot_dimension_numbers<[1], [0], [0], [1], [0, 0, 1, 1], [], []>} : vector<8x8xf32>, vector<8x256xf32>, vector<8x256xf32> -> vector<8x256xf32>
    %109 = arith.addf %100, %108 : vector<8x256xf32>
    %c1_i32_81 = arith.constant 1 : i32
    %110 = tpu.dynamic_rotate %83 by %c1_i32_81 dim 1 : vector<8x256xf32>, i32 -> vector<8x256xf32>
    %c3_82 = arith.constant 3 : index
    %c0_83 = arith.constant 0 : index
    %c0_84 = arith.constant 0 : index
    %111 = vector.load %arg7[%c3_82, %c0_83, %c0_84] : memref<9x1x256xf32, #tpu.memory_space<vmem>>, vector<1x1x256xf32>
    %112 = vector.shape_cast %111 : vector<1x1x256xf32> to vector<1x256xf32>
    %113 = vector.broadcast %112 : vector<1x256xf32> to vector<8x256xf32>
    %114 = arith.mulf %110, %113 : vector<8x256xf32>
    %c3_85 = arith.constant 3 : index
    %c0_86 = arith.constant 0 : index
    %c0_87 = arith.constant 0 : index
    %115 = vector.load %arg2[%c3_85, %c0_86, %c0_87] : memref<9x8x8xf32, #tpu.memory_space<vmem>>, vector<1x8x8xf32>
    %116 = vector.shape_cast %115 : vector<1x8x8xf32> to vector<8x8xf32>
    %cst_88 = arith.constant dense<0.000000e+00> : vector<8x256xf32>
    %117 = tpu.matmul %116, %114, %cst_88 {dimension_numbers = #tpu.dot_dimension_numbers<[1], [0], [0], [1], [0, 0, 1, 1], [], []>} : vector<8x8xf32>, vector<8x256xf32>, vector<8x256xf32> -> vector<8x256xf32>
    %118 = arith.addf %109, %117 : vector<8x256xf32>
    %c4_89 = arith.constant 4 : index
    %c0_90 = arith.constant 0 : index
    %c0_91 = arith.constant 0 : index
    %119 = vector.load %arg2[%c4_89, %c0_90, %c0_91] : memref<9x8x8xf32, #tpu.memory_space<vmem>>, vector<1x8x8xf32>
    %120 = vector.shape_cast %119 : vector<1x8x8xf32> to vector<8x8xf32>
    %cst_92 = arith.constant dense<0.000000e+00> : vector<8x256xf32>
    %121 = tpu.matmul %120, %83, %cst_92 {dimension_numbers = #tpu.dot_dimension_numbers<[1], [0], [0], [1], [0, 0, 1, 1], [], []>} : vector<8x8xf32>, vector<8x256xf32>, vector<8x256xf32> -> vector<8x256xf32>
    %122 = arith.addf %118, %121 : vector<8x256xf32>
    %c255_i32_93 = arith.constant 255 : i32
    %123 = tpu.dynamic_rotate %83 by %c255_i32_93 dim 1 : vector<8x256xf32>, i32 -> vector<8x256xf32>
    %c5_94 = arith.constant 5 : index
    %c0_95 = arith.constant 0 : index
    %c0_96 = arith.constant 0 : index
    %124 = vector.load %arg7[%c5_94, %c0_95, %c0_96] : memref<9x1x256xf32, #tpu.memory_space<vmem>>, vector<1x1x256xf32>
    %125 = vector.shape_cast %124 : vector<1x1x256xf32> to vector<1x256xf32>
    %126 = vector.broadcast %125 : vector<1x256xf32> to vector<8x256xf32>
    %127 = arith.mulf %123, %126 : vector<8x256xf32>
    %c5_97 = arith.constant 5 : index
    %c0_98 = arith.constant 0 : index
    %c0_99 = arith.constant 0 : index
    %128 = vector.load %arg2[%c5_97, %c0_98, %c0_99] : memref<9x8x8xf32, #tpu.memory_space<vmem>>, vector<1x8x8xf32>
    %129 = vector.shape_cast %128 : vector<1x8x8xf32> to vector<8x8xf32>
    %cst_100 = arith.constant dense<0.000000e+00> : vector<8x256xf32>
    %130 = tpu.matmul %129, %127, %cst_100 {dimension_numbers = #tpu.dot_dimension_numbers<[1], [0], [0], [1], [0, 0, 1, 1], [], []>} : vector<8x8xf32>, vector<8x256xf32>, vector<8x256xf32> -> vector<8x256xf32>
    %131 = arith.addf %122, %130 : vector<8x256xf32>
    %c241_i32_101 = arith.constant 241 : i32
    %132 = tpu.dynamic_rotate %83 by %c241_i32_101 dim 1 : vector<8x256xf32>, i32 -> vector<8x256xf32>
    %c6_102 = arith.constant 6 : index
    %c0_103 = arith.constant 0 : index
    %c0_104 = arith.constant 0 : index
    %133 = vector.load %arg7[%c6_102, %c0_103, %c0_104] : memref<9x1x256xf32, #tpu.memory_space<vmem>>, vector<1x1x256xf32>
    %134 = vector.shape_cast %133 : vector<1x1x256xf32> to vector<1x256xf32>
    %135 = vector.broadcast %134 : vector<1x256xf32> to vector<8x256xf32>
    %136 = arith.mulf %132, %135 : vector<8x256xf32>
    %c6_105 = arith.constant 6 : index
    %c0_106 = arith.constant 0 : index
    %c0_107 = arith.constant 0 : index
    %137 = vector.load %arg2[%c6_105, %c0_106, %c0_107] : memref<9x8x8xf32, #tpu.memory_space<vmem>>, vector<1x8x8xf32>
    %138 = vector.shape_cast %137 : vector<1x8x8xf32> to vector<8x8xf32>
    %cst_108 = arith.constant dense<0.000000e+00> : vector<8x256xf32>
    %139 = tpu.matmul %138, %136, %cst_108 {dimension_numbers = #tpu.dot_dimension_numbers<[1], [0], [0], [1], [0, 0, 1, 1], [], []>} : vector<8x8xf32>, vector<8x256xf32>, vector<8x256xf32> -> vector<8x256xf32>
    %140 = arith.addf %131, %139 : vector<8x256xf32>
    %c240_i32_109 = arith.constant 240 : i32
    %141 = tpu.dynamic_rotate %83 by %c240_i32_109 dim 1 : vector<8x256xf32>, i32 -> vector<8x256xf32>
    %c7_110 = arith.constant 7 : index
    %c0_111 = arith.constant 0 : index
    %c0_112 = arith.constant 0 : index
    %142 = vector.load %arg7[%c7_110, %c0_111, %c0_112] : memref<9x1x256xf32, #tpu.memory_space<vmem>>, vector<1x1x256xf32>
    %143 = vector.shape_cast %142 : vector<1x1x256xf32> to vector<1x256xf32>
    %144 = vector.broadcast %143 : vector<1x256xf32> to vector<8x256xf32>
    %145 = arith.mulf %141, %144 : vector<8x256xf32>
    %c7_113 = arith.constant 7 : index
    %c0_114 = arith.constant 0 : index
    %c0_115 = arith.constant 0 : index
    %146 = vector.load %arg2[%c7_113, %c0_114, %c0_115] : memref<9x8x8xf32, #tpu.memory_space<vmem>>, vector<1x8x8xf32>
    %147 = vector.shape_cast %146 : vector<1x8x8xf32> to vector<8x8xf32>
    %cst_116 = arith.constant dense<0.000000e+00> : vector<8x256xf32>
    %148 = tpu.matmul %147, %145, %cst_116 {dimension_numbers = #tpu.dot_dimension_numbers<[1], [0], [0], [1], [0, 0, 1, 1], [], []>} : vector<8x8xf32>, vector<8x256xf32>, vector<8x256xf32> -> vector<8x256xf32>
    %149 = arith.addf %140, %148 : vector<8x256xf32>
    %c239_i32_117 = arith.constant 239 : i32
    %150 = tpu.dynamic_rotate %83 by %c239_i32_117 dim 1 : vector<8x256xf32>, i32 -> vector<8x256xf32>
    %c8_118 = arith.constant 8 : index
    %c0_119 = arith.constant 0 : index
    %c0_120 = arith.constant 0 : index
    %151 = vector.load %arg7[%c8_118, %c0_119, %c0_120] : memref<9x1x256xf32, #tpu.memory_space<vmem>>, vector<1x1x256xf32>
    %152 = vector.shape_cast %151 : vector<1x1x256xf32> to vector<1x256xf32>
    %153 = vector.broadcast %152 : vector<1x256xf32> to vector<8x256xf32>
    %154 = arith.mulf %150, %153 : vector<8x256xf32>
    %c8_121 = arith.constant 8 : index
    %c0_122 = arith.constant 0 : index
    %c0_123 = arith.constant 0 : index
    %155 = vector.load %arg2[%c8_121, %c0_122, %c0_123] : memref<9x8x8xf32, #tpu.memory_space<vmem>>, vector<1x8x8xf32>
    %156 = vector.shape_cast %155 : vector<1x8x8xf32> to vector<8x8xf32>
    %cst_124 = arith.constant dense<0.000000e+00> : vector<8x256xf32>
    %157 = tpu.matmul %156, %154, %cst_124 {dimension_numbers = #tpu.dot_dimension_numbers<[1], [0], [0], [1], [0, 0, 1, 1], [], []>} : vector<8x8xf32>, vector<8x256xf32>, vector<8x256xf32> -> vector<8x256xf32>
    %158 = arith.addf %149, %157 : vector<8x256xf32>
    %c0_125 = arith.constant 0 : index
    %c0_126 = arith.constant 0 : index
    %159 = vector.load %arg5[%c0_125, %c0_126] : memref<8x1xf32, #tpu.memory_space<vmem>>, vector<8x1xf32>
    %160 = vector.broadcast %159 : vector<8x1xf32> to vector<8x256xf32>
    %161 = arith.mulf %158, %160 : vector<8x256xf32>
    %c0_127 = arith.constant 0 : index
    %c0_128 = arith.constant 0 : index
    %162 = vector.load %arg6[%c0_127, %c0_128] : memref<8x1xf32, #tpu.memory_space<vmem>>, vector<8x1xf32>
    %163 = vector.broadcast %162 : vector<8x1xf32> to vector<8x256xf32>
    %164 = arith.addf %161, %163 : vector<8x256xf32>
    %165 = arith.addf %164, %0 : vector<8x256xf32>
    %cst_129 = arith.constant 0.000000e+00 : f32
    %166 = vector.broadcast %cst_129 : f32 to vector<8x256xf32>
    %167 = arith.maximumf %165, %166 : vector<8x256xf32>
    %c0_130 = arith.constant 0 : index
    %c0_131 = arith.constant 0 : index
    %168 = vector.load %arg8[%c0_130, %c0_131] : memref<8x256xf32, #tpu.memory_space<vmem>>, vector<8x256xf32>
    tpu.vector_store %arg8[%c0_130, %c0_131], %167 {strides = array<i32>} : memref<8x256xf32, #tpu.memory_space<vmem>>, vector<8x256xf32>,
    return
  }
}

</mosaic_0001>

<llo_original>
// kernel: tpu_custom_call.1
$region0: #{tpu_custom_call.1}
  #allocation0 [shape = 'u32[]', space=smem, size = 0x4, offset = 0x4, fixed_abs, tag = 'smem constant byte address 0x4 - core index']
  #allocation1 [shape = 'u32[72,128]{1,0:T(1,128)}', space=vmem, size = 0x9000, scoped, tag = 'internal scratch']
  %s0 = inlined_call_operand.vmem [shape: f32[8,256], index: 0, kind: input, shape index: {}]
  %s1 = inlined_call_operand.vmem [shape: f32[9,8,8], index: 1, kind: input, shape index: {}]
  %s2 = inlined_call_operand.vmem [shape: f32[9,8,8], index: 2, kind: input, shape index: {}]
  %s3 = inlined_call_operand.vmem [shape: f32[8,1], index: 3, kind: input, shape index: {}]
  %s4 = inlined_call_operand.vmem [shape: f32[8,1], index: 4, kind: input, shape index: {}]
  %s5 = inlined_call_operand.vmem [shape: f32[8,1], index: 5, kind: input, shape index: {}]
  %s6 = inlined_call_operand.vmem [shape: f32[8,1], index: 6, kind: input, shape index: {}]
  %s7 = inlined_call_operand.vmem [shape: f32[9,1,256], index: 7, kind: input, shape index: {}]
  %s8 = inlined_call_operand.hbm [shape: f32[8,256], index: 8, kind: output, shape index: {}]
  %s9 = sld [smem:[#allocation0]]
  $region42: #{tpu_custom_call.1} parent=0
    _
  %s11 = ssub.s32 1, %s9
  %s12 = scalar_select 0, %s11, %s9
  $region1: #{tpu_custom_call.1} parent=0
    #allocation2 [shape = 'u8[8192]{0}', space=vmem, size = 0x2000, scoped, tag = 'output window, operand 0, single buffered']
    #allocation3 [shape = 's32[1]{0}', space=sflag, size = 0x4, scoped, tag = 'scoped memory for tpu_custom_call.1']
    %13 = vsyncpa [#allocation3], 0
    // Predicated region
    $region2: #{tpu_custom_call.1} parent=1 // pred_check
      _
    $region3: #{tpu_custom_call.1} parent=1 // pred_check_branch
      %15 = sbr.rel (0) target = $region5
    $region4: #{tpu_custom_call.1} parent=1 // pred_region
      _
    $region5: #{tpu_custom_call.1} parent=1 // pred_fallthru
      _
    // Predicated region
    $region6: #{tpu_custom_call.1} parent=1 // pred_check
      _
    $region7: #{tpu_custom_call.1} parent=1 // pred_check_branch
      %17 = sbr.rel (0) target = $region9
    $region8: #{tpu_custom_call.1} parent=1 // pred_region
      _
    $region9: #{tpu_custom_call.1} parent=1 // pred_fallthru
      _
    // Predicated region
    $region10: #{tpu_custom_call.1} parent=1 // pred_check
      _
    $region11: #{tpu_custom_call.1} parent=1 // pred_check_branch
      %19 = sbr.rel (0) target = $region13
    $region12: #{tpu_custom_call.1} parent=1 // pred_region
      _
    $region13: #{tpu_custom_call.1} parent=1 // pred_fallthru
      _
    // Predicated region
    $region14: #{tpu_custom_call.1} parent=1 // pred_check
      _
    $region15: #{tpu_custom_call.1} parent=1 // pred_check_branch
      %21 = sbr.rel (0) target = $region17
    $region16: #{tpu_custom_call.1} parent=1 // pred_region
      _
    $region17: #{tpu_custom_call.1} parent=1 // pred_fallthru
      _
    // Predicated region
    $region18: #{tpu_custom_call.1} parent=1 // pred_check
      _
    $region19: #{tpu_custom_call.1} parent=1 // pred_check_branch
      %23 = sbr.rel (0) target = $region21
    $region20: #{tpu_custom_call.1} parent=1 // pred_region
      _
    $region21: #{tpu_custom_call.1} parent=1 // pred_fallthru
      _
    // Predicated region
    $region22: #{tpu_custom_call.1} parent=1 // pred_check
      _
    $region23: #{tpu_custom_call.1} parent=1 // pred_check_branch
      %25 = sbr.rel (0) target = $region25
    $region24: #{tpu_custom_call.1} parent=1 // pred_region
      _
    $region25: #{tpu_custom_call.1} parent=1 // pred_fallthru
      _
    // Predicated region
    $region26: #{tpu_custom_call.1} parent=1 // pred_check
      _
    $region27: #{tpu_custom_call.1} parent=1 // pred_check_branch
      %27 = sbr.rel (0) target = $region29
    $region28: #{tpu_custom_call.1} parent=1 // pred_region
      _
    $region29: #{tpu_custom_call.1} parent=1 // pred_fallthru
      _
    // Predicated region
    $region30: #{tpu_custom_call.1} parent=1 // pred_check
      _
    $region31: #{tpu_custom_call.1} parent=1 // pred_check_branch
      %29 = sbr.rel (0) target = $region33
    $region32: #{tpu_custom_call.1} parent=1 // pred_region
      _
    $region33: #{tpu_custom_call.1} parent=1 // pred_fallthru
      _
    %v30 = vld [vmem:[%s0] sm:$0xff]
    %v31 = vld [vmem:[%s0 + $0x8] sm:$0xff]
    %32 = vrot.lane.b32.xlu0 %v30, 17
    %v33 = vpop.permute.xlu0 %32
    %34 = vrot.lane.b32.xlu0 %v31, 17
    %v35 = vpop.permute.xlu0 %34
    %v36 = vlaneseq
    %v37 = vand.u32 %v36, 127
    %vm38 = vcmp.lt.s32.totalorder %v37, 17
    %v39 = vsel %vm38, %v33, %v35
    %v40 = vsel %vm38, %v35, %v33
    %v41 = vld [vmem:[%s7] sm:$0x3]
    %v43 = vperm.slane %v41, 0
    %v44 = vperm.slane %v41, 1
    %v47 = vmul.f32 %v40, %v43
    %v48 = vmul.f32 %v39, %v44
    %v49 = vld [vmem:[%s1] sm:$0xff]
    %50 = vrot.lane.b32.xlu0 %v30, 16
    %v51 = vpop.permute.xlu0 %50
    %52 = vrot.lane.b32.xlu0 %v31, 16
    %v53 = vpop.permute.xlu0 %52
    %vm54 = vcmp.lt.s32.totalorder %v37, 16
    %v55 = vsel %vm54, %v51, %v53
    %v56 = vsel %vm54, %v53, %v51
    %s57 = scalar_lea.vmem %s7, 2
    %v58 = vld [vmem:[%s57] sm:$0x3]
    %v60 = vperm.slane %v58, 0
    %v61 = vperm.slane %v58, 1
    %v64 = vmul.f32 %v56, %v60
    %v65 = vmul.f32 %v55, %v61
    %s66 = scalar_lea.vmem %s1, 8
    %v67 = vld [vmem:[%s66] sm:$0xff]
    %vm68 = vcmask 64512
    %v70 = vsel %vm68, %v67, 0
    %72 = vmatpush.msra.mxu0 0.0
    %73 = vmatpush.msra.mxu0 0.0
    %74 = vmatpush.msra.mxu0 0.0
    %75 = vmatpush.msra.mxu0 0.0
    %76 = vmatpush.msra.mxu0 0.0
    %77 = vmatpush.msra.mxu0 0.0
    %78 = vmatpush.msra.mxu0 0.0
    %79 = vmatpush.msra.mxu0 0.0
    %80 = vmatpush.msra.mxu0 0.0
    %81 = vmatpush.msra.mxu0 0.0
    %82 = vmatpush.msra.mxu0 0.0
    %83 = vmatpush.msra.mxu0 0.0
    %84 = vmatpush.msra.mxu0 0.0
    %85 = vmatpush.msra.mxu0 0.0
    %86 = vmatpush.msra.mxu0 0.0
    %87 = vmatpush.msra.mxu0 %v64
    %88 = vmatmul.f32.gmra.mxu0 %v70
    %v89 = vpop.f32.mrf.mxu0
    %v90 = vadd.f32 0.0, %v89
    %91 = vdwg.mxu0
    %92 = vmatpush.msra.mxu0 0.0
    %93 = vmatpush.msra.mxu0 0.0
    %94 = vmatpush.msra.mxu0 0.0
    %95 = vmatpush.msra.mxu0 0.0
    %96 = vmatpush.msra.mxu0 0.0
    %97 = vmatpush.msra.mxu0 0.0
    %98 = vmatpush.msra.mxu0 0.0
    %99 = vmatpush.msra.mxu0 0.0
    %100 = vmatpush.msra.mxu0 0.0
    %101 = vmatpush.msra.mxu0 0.0
    %102 = vmatpush.msra.mxu0 0.0
    %103 = vmatpush.msra.mxu0 0.0
    %104 = vmatpush.msra.mxu0 0.0
    %105 = vmatpush.msra.mxu0 0.0
    %106 = vmatpush.msra.mxu0 0.0
    %107 = vmatpush.msra.mxu0 %v65
    %108 = vmatmul.f32.gmra.mxu0 %v70
    %v109 = vpop.f32.mrf.mxu0
    %v110 = vadd.f32 0.0, %v109
    %111 = vdwg.mxu0
    %v113 = vsel %vm68, %v49, 0
    %115 = vmatpush.msra.mxu0 0.0
    %116 = vmatpush.msra.mxu0 0.0
    %117 = vmatpush.msra.mxu0 0.0
    %118 = vmatpush.msra.mxu0 0.0
    %119 = vmatpush.msra.mxu0 0.0
    %120 = vmatpush.msra.mxu0 0.0
    %121 = vmatpush.msra.mxu0 0.0
    %122 = vmatpush.msra.mxu0 0.0
    %123 = vmatpush.msra.mxu0 0.0
    %124 = vmatpush.msra.mxu0 0.0
    %125 = vmatpush.msra.mxu0 0.0
    %126 = vmatpush.msra.mxu0 0.0
    %127 = vmatpush.msra.mxu0 0.0
    %128 = vmatpush.msra.mxu0 0.0
    %129 = vmatpush.msra.mxu0 0.0
    %130 = vmatpush.msra.mxu0 %v47
    %131 = vmatmul.f32.gmra.mxu0 %v113
    %v132 = vpop.f32.mrf.mxu0
    %v133 = vadd.f32 %v90, %v132
    %134 = vdwg.mxu0
    %135 = vmatpush.msra.mxu0 0.0
    %136 = vmatpush.msra.mxu0 0.0
    %137 = vmatpush.msra.mxu0 0.0
    %138 = vmatpush.msra.mxu0 0.0
    %139 = vmatpush.msra.mxu0 0.0
    %140 = vmatpush.msra.mxu0 0.0
    %141 = vmatpush.msra.mxu0 0.0
    %142 = vmatpush.msra.mxu0 0.0
    %143 = vmatpush.msra.mxu0 0.0
    %144 = vmatpush.msra.mxu0 0.0
    %145 = vmatpush.msra.mxu0 0.0
    %146 = vmatpush.msra.mxu0 0.0
    %147 = vmatpush.msra.mxu0 0.0
    %148 = vmatpush.msra.mxu0 0.0
    %149 = vmatpush.msra.mxu0 0.0
    %150 = vmatpush.msra.mxu0 %v48
    %151 = vmatmul.f32.gmra.mxu0 %v113
    %v152 = vpop.f32.mrf.mxu0
    %v153 = vadd.f32 %v110, %v152
    %154 = vdwg.mxu0
    %155 = vrot.lane.b32.xlu0 %v30, 15
    %v156 = vpop.permute.xlu0 %155
    %157 = vrot.lane.b32.xlu0 %v31, 15
    %v158 = vpop.permute.xlu0 %157
    %vm159 = vcmp.lt.s32.totalorder %v37, 15
    %v160 = vsel %vm159, %v156, %v158
    %v161 = vsel %vm159, %v158, %v156
    %s162 = scalar_lea.vmem %s7, 4
    %v163 = vld [vmem:[%s162] sm:$0x3]
    %v165 = vperm.slane %v163, 0
    %v166 = vperm.slane %v163, 1
    %v169 = vmul.f32 %v161, %v165
    %v170 = vmul.f32 %v160, %v166
    %s171 = scalar_lea.vmem %s1, 16
    %v172 = vld [vmem:[%s171] sm:$0xff]
    %v174 = vsel %vm68, %v172, 0
    %176 = vmatpush.msra.mxu0 0.0
    %177 = vmatpush.msra.mxu0 0.0
    %178 = vmatpush.msra.mxu0 0.0
    %179 = vmatpush.msra.mxu0 0.0
    %180 = vmatpush.msra.mxu0 0.0
    %181 = vmatpush.msra.mxu0 0.0
    %182 = vmatpush.msra.mxu0 0.0
    %183 = vmatpush.msra.mxu0 0.0
    %184 = vmatpush.msra.mxu0 0.0
    %185 = vmatpush.msra.mxu0 0.0
    %186 = vmatpush.msra.mxu0 0.0
    %187 = vmatpush.msra.mxu0 0.0
    %188 = vmatpush.msra.mxu0 0.0
    %189 = vmatpush.msra.mxu0 0.0
    %190 = vmatpush.msra.mxu0 0.0
    %191 = vmatpush.msra.mxu0 %v169
    %192 = vmatmul.f32.gmra.mxu0 %v174
    %v193 = vpop.f32.mrf.mxu0
    %v194 = vadd.f32 0.0, %v193
    %195 = vdwg.mxu0
    %196 = vmatpush.msra.mxu0 0.0
    %197 = vmatpush.msra.mxu0 0.0
    %198 = vmatpush.msra.mxu0 0.0
    %199 = vmatpush.msra.mxu0 0.0
    %200 = vmatpush.msra.mxu0 0.0
    %201 = vmatpush.msra.mxu0 0.0
    %202 = vmatpush.msra.mxu0 0.0
    %203 = vmatpush.msra.mxu0 0.0
    %204 = vmatpush.msra.mxu0 0.0
    %205 = vmatpush.msra.mxu0 0.0
    %206 = vmatpush.msra.mxu0 0.0
    %207 = vmatpush.msra.mxu0 0.0
    %208 = vmatpush.msra.mxu0 0.0
    %209 = vmatpush.msra.mxu0 0.0
    %210 = vmatpush.msra.mxu0 0.0
    %211 = vmatpush.msra.mxu0 %v170
    %212 = vmatmul.f32.gmra.mxu0 %v174
    %v213 = vpop.f32.mrf.mxu0
    %v214 = vadd.f32 0.0, %v213
    %215 = vdwg.mxu0
    %v216 = vadd.f32 %v133, %v194
    %v217 = vadd.f32 %v153, %v214
    %218 = vrot.lane.b32.xlu0 %v30, 1
    %v219 = vpop.permute.xlu0 %218
    %220 = vrot.lane.b32.xlu0 %v31, 1
    %v221 = vpop.permute.xlu0 %220
    %vm222 = vcmp.lt.s32.totalorder %v37, 1
    %v223 = vsel %vm222, %v219, %v221
    %v224 = vsel %vm222, %v221, %v219
    %s225 = scalar_lea.vmem %s7, 6
    %v226 = vld [vmem:[%s225] sm:$0x3]
    %v228 = vperm.slane %v226, 0
    %v229 = vperm.slane %v226, 1
    %v232 = vmul.f32 %v224, %v228
    %v233 = vmul.f32 %v223, %v229
    %s234 = scalar_lea.vmem %s1, 24
    %v235 = vld [vmem:[%s234] sm:$0xff]
    %v237 = vsel %vm68, %v235, 0
    %239 = vmatpush.msra.mxu0 0.0
    %240 = vmatpush.msra.mxu0 0.0
    %241 = vmatpush.msra.mxu0 0.0
    %242 = vmatpush.msra.mxu0 0.0
    %243 = vmatpush.msra.mxu0 0.0
    %244 = vmatpush.msra.mxu0 0.0
    %245 = vmatpush.msra.mxu0 0.0
    %246 = vmatpush.msra.mxu0 0.0
    %247 = vmatpush.msra.mxu0 0.0
    %248 = vmatpush.msra.mxu0 0.0
    %249 = vmatpush.msra.mxu0 0.0
    %250 = vmatpush.msra.mxu0 0.0
    %251 = vmatpush.msra.mxu0 0.0
    %252 = vmatpush.msra.mxu0 0.0
    %253 = vmatpush.msra.mxu0 0.0
    %254 = vmatpush.msra.mxu0 %v232
    %255 = vmatmul.f32.gmra.mxu0 %v237
    %v256 = vpop.f32.mrf.mxu0
    %v257 = vadd.f32 0.0, %v256
    %258 = vdwg.mxu0
    %259 = vmatpush.msra.mxu0 0.0
    %260 = vmatpush.msra.mxu0 0.0
    %261 = vmatpush.msra.mxu0 0.0
    %262 = vmatpush.msra.mxu0 0.0
    %263 = vmatpush.msra.mxu0 0.0
    %264 = vmatpush.msra.mxu0 0.0
    %265 = vmatpush.msra.mxu0 0.0
    %266 = vmatpush.msra.mxu0 0.0
    %267 = vmatpush.msra.mxu0 0.0
    %268 = vmatpush.msra.mxu0 0.0
    %269 = vmatpush.msra.mxu0 0.0
    %270 = vmatpush.msra.mxu0 0.0
    %271 = vmatpush.msra.mxu0 0.0
    %272 = vmatpush.msra.mxu0 0.0
    %273 = vmatpush.msra.mxu0 0.0
    %274 = vmatpush.msra.mxu0 %v233
    %275 = vmatmul.f32.gmra.mxu0 %v237
    %v276 = vpop.f32.mrf.mxu0
    %v277 = vadd.f32 0.0, %v276
    %278 = vdwg.mxu0
    %v279 = vadd.f32 %v216, %v257
    %v280 = vadd.f32 %v217, %v277
    %s281 = scalar_lea.vmem %s1, 32
    %v282 = vld [vmem:[%s281] sm:$0xff]
    %v284 = vsel %vm68, %v282, 0
    %286 = vmatpush.msra.mxu0 0.0
    %287 = vmatpush.msra.mxu0 0.0
    %288 = vmatpush.msra.mxu0 0.0
    %289 = vmatpush.msra.mxu0 0.0
    %290 = vmatpush.msra.mxu0 0.0
    %291 = vmatpush.msra.mxu0 0.0
    %292 = vmatpush.msra.mxu0 0.0
    %293 = vmatpush.msra.mxu0 0.0
    %294 = vmatpush.msra.mxu0 0.0
    %295 = vmatpush.msra.mxu0 0.0
    %296 = vmatpush.msra.mxu0 0.0
    %297 = vmatpush.msra.mxu0 0.0
    %298 = vmatpush.msra.mxu0 0.0
    %299 = vmatpush.msra.mxu0 0.0
    %300 = vmatpush.msra.mxu0 0.0
    %301 = vmatpush.msra.mxu0 %v30
    %302 = vmatmul.f32.gmra.mxu0 %v284
    %v303 = vpop.f32.mrf.mxu0
    %v304 = vadd.f32 0.0, %v303
    %305 = vdwg.mxu0
    %306 = vmatpush.msra.mxu0 0.0
    %307 = vmatpush.msra.mxu0 0.0
    %308 = vmatpush.msra.mxu0 0.0
    %309 = vmatpush.msra.mxu0 0.0
    %310 = vmatpush.msra.mxu0 0.0
    %311 = vmatpush.msra.mxu0 0.0
    %312 = vmatpush.msra.mxu0 0.0
    %313 = vmatpush.msra.mxu0 0.0
    %314 = vmatpush.msra.mxu0 0.0
    %315 = vmatpush.msra.mxu0 0.0
    %316 = vmatpush.msra.mxu0 0.0
    %317 = vmatpush.msra.mxu0 0.0
    %318 = vmatpush.msra.mxu0 0.0
    %319 = vmatpush.msra.mxu0 0.0
    %320 = vmatpush.msra.mxu0 0.0
    %321 = vmatpush.msra.mxu0 %v31
    %322 = vmatmul.f32.gmra.mxu0 %v284
    %v323 = vpop.f32.mrf.mxu0
    %v324 = vadd.f32 0.0, %v323
    %325 = vdwg.mxu0
    %v326 = vadd.f32 %v279, %v304
    %v327 = vadd.f32 %v280, %v324
    %328 = vrot.lane.b32.xlu0 %v30, 127
    %v329 = vpop.permute.xlu0 %328
    %330 = vrot.lane.b32.xlu0 %v31, 127
    %v331 = vpop.permute.xlu0 %330
    %vm332 = vcmp.lt.s32.totalorder %v37, 127
    %v333 = vsel %vm332, %v329, %v331
    %v334 = vsel %vm332, %v331, %v329
    %s335 = scalar_lea.vmem %s7, 10
    %v336 = vld [vmem:[%s335] sm:$0x3]
    %v338 = vperm.slane %v336, 0
    %v339 = vperm.slane %v336, 1
    %v342 = vmul.f32 %v333, %v338
    %v343 = vmul.f32 %v334, %v339
    %s344 = scalar_lea.vmem %s1, 40
    %v345 = vld [vmem:[%s344] sm:$0xff]
    %v347 = vsel %vm68, %v345, 0
    %349 = vmatpush.msra.mxu0 0.0
    %350 = vmatpush.msra.mxu0 0.0
    %351 = vmatpush.msra.mxu0 0.0
    %352 = vmatpush.msra.mxu0 0.0
    %353 = vmatpush.msra.mxu0 0.0
    %354 = vmatpush.msra.mxu0 0.0
    %355 = vmatpush.msra.mxu0 0.0
    %356 = vmatpush.msra.mxu0 0.0
    %357 = vmatpush.msra.mxu0 0.0
    %358 = vmatpush.msra.mxu0 0.0
    %359 = vmatpush.msra.mxu0 0.0
    %360 = vmatpush.msra.mxu0 0.0
    %361 = vmatpush.msra.mxu0 0.0
    %362 = vmatpush.msra.mxu0 0.0
    %363 = vmatpush.msra.mxu0 0.0
    %364 = vmatpush.msra.mxu0 %v342
    %365 = vmatmul.f32.gmra.mxu0 %v347
    %v366 = vpop.f32.mrf.mxu0
    %v367 = vadd.f32 0.0, %v366
    %368 = vdwg.mxu0
    %369 = vmatpush.msra.mxu0 0.0
    %370 = vmatpush.msra.mxu0 0.0
    %371 = vmatpush.msra.mxu0 0.0
    %372 = vmatpush.msra.mxu0 0.0
    %373 = vmatpush.msra.mxu0 0.0
    %374 = vmatpush.msra.mxu0 0.0
    %375 = vmatpush.msra.mxu0 0.0
    %376 = vmatpush.msra.mxu0 0.0
    %377 = vmatpush.msra.mxu0 0.0
    %378 = vmatpush.msra.mxu0 0.0
    %379 = vmatpush.msra.mxu0 0.0
    %380 = vmatpush.msra.mxu0 0.0
    %381 = vmatpush.msra.mxu0 0.0
    %382 = vmatpush.msra.mxu0 0.0
    %383 = vmatpush.msra.mxu0 0.0
    %384 = vmatpush.msra.mxu0 %v343
    %385 = vmatmul.f32.gmra.mxu0 %v347
    %v386 = vpop.f32.mrf.mxu0
    %v387 = vadd.f32 0.0, %v386
    %388 = vdwg.mxu0
    %v389 = vadd.f32 %v326, %v367
    %v390 = vadd.f32 %v327, %v387
    %391 = vrot.lane.b32.xlu0 %v30, 113
    %v392 = vpop.permute.xlu0 %391
    %393 = vrot.lane.b32.xlu0 %v31, 113
    %v394 = vpop.permute.xlu0 %393
    %vm395 = vcmp.lt.s32.totalorder %v37, 113
    %v396 = vsel %vm395, %v392, %v394
    %v397 = vsel %vm395, %v394, %v392
    %s398 = scalar_lea.vmem %s7, 12
    %v399 = vld [vmem:[%s398] sm:$0x3]
    %v401 = vperm.slane %v399, 0
    %v402 = vperm.slane %v399, 1
    %v405 = vmul.f32 %v396, %v401
    %v406 = vmul.f32 %v397, %v402
    %s407 = scalar_lea.vmem %s1, 48
    %v408 = vld [vmem:[%s407] sm:$0xff]
    %v410 = vsel %vm68, %v408, 0
    %412 = vmatpush.msra.mxu0 0.0
    %413 = vmatpush.msra.mxu0 0.0
    %414 = vmatpush.msra.mxu0 0.0
    %415 = vmatpush.msra.mxu0 0.0
    %416 = vmatpush.msra.mxu0 0.0
    %417 = vmatpush.msra.mxu0 0.0
    %418 = vmatpush.msra.mxu0 0.0
    %419 = vmatpush.msra.mxu0 0.0
    %420 = vmatpush.msra.mxu0 0.0
    %421 = vmatpush.msra.mxu0 0.0
    %422 = vmatpush.msra.mxu0 0.0
    %423 = vmatpush.msra.mxu0 0.0
    %424 = vmatpush.msra.mxu0 0.0
    %425 = vmatpush.msra.mxu0 0.0
    %426 = vmatpush.msra.mxu0 0.0
    %427 = vmatpush.msra.mxu0 %v405
    %428 = vmatmul.f32.gmra.mxu0 %v410
    %v429 = vpop.f32.mrf.mxu0
    %v430 = vadd.f32 0.0, %v429
    %431 = vdwg.mxu0
    %432 = vmatpush.msra.mxu0 0.0
    %433 = vmatpush.msra.mxu0 0.0
    %434 = vmatpush.msra.mxu0 0.0
    %435 = vmatpush.msra.mxu0 0.0
    %436 = vmatpush.msra.mxu0 0.0
    %437 = vmatpush.msra.mxu0 0.0
    %438 = vmatpush.msra.mxu0 0.0
    %439 = vmatpush.msra.mxu0 0.0
    %440 = vmatpush.msra.mxu0 0.0
    %441 = vmatpush.msra.mxu0 0.0
    %442 = vmatpush.msra.mxu0 0.0
    %443 = vmatpush.msra.mxu0 0.0
    %444 = vmatpush.msra.mxu0 0.0
    %445 = vmatpush.msra.mxu0 0.0
    %446 = vmatpush.msra.mxu0 0.0
    %447 = vmatpush.msra.mxu0 %v406
    %448 = vmatmul.f32.gmra.mxu0 %v410
    %v449 = vpop.f32.mrf.mxu0
    %v450 = vadd.f32 0.0, %v449
    %451 = vdwg.mxu0
    %v452 = vadd.f32 %v389, %v430
    %v453 = vadd.f32 %v390, %v450
    %454 = vrot.lane.b32.xlu0 %v30, 112
    %v455 = vpop.permute.xlu0 %454
    %456 = vrot.lane.b32.xlu0 %v31, 112
    %v457 = vpop.permute.xlu0 %456
    %vm458 = vcmp.lt.s32.totalorder %v37, 112
    %v459 = vsel %vm458, %v455, %v457
    %v460 = vsel %vm458, %v457, %v455
    %s461 = scalar_lea.vmem %s7, 14
    %v462 = vld [vmem:[%s461] sm:$0x3]
    %v464 = vperm.slane %v462, 0
    %v465 = vperm.slane %v462, 1
    %v468 = vmul.f32 %v459, %v464
    %v469 = vmul.f32 %v460, %v465
    %s470 = scalar_lea.vmem %s1, 56
    %v471 = vld [vmem:[%s470] sm:$0xff]
    %v473 = vsel %vm68, %v471, 0
    %475 = vmatpush.msra.mxu0 0.0
    %476 = vmatpush.msra.mxu0 0.0
    %477 = vmatpush.msra.mxu0 0.0
    %478 = vmatpush.msra.mxu0 0.0
    %479 = vmatpush.msra.mxu0 0.0
    %480 = vmatpush.msra.mxu0 0.0
    %481 = vmatpush.msra.mxu0 0.0
    %482 = vmatpush.msra.mxu0 0.0
    %483 = vmatpush.msra.mxu0 0.0
    %484 = vmatpush.msra.mxu0 0.0
    %485 = vmatpush.msra.mxu0 0.0
    %486 = vmatpush.msra.mxu0 0.0
    %487 = vmatpush.msra.mxu0 0.0
    %488 = vmatpush.msra.mxu0 0.0
    %489 = vmatpush.msra.mxu0 0.0
    %490 = vmatpush.msra.mxu0 %v468
    %491 = vmatmul.f32.gmra.mxu0 %v473
    %v492 = vpop.f32.mrf.mxu0
    %v493 = vadd.f32 0.0, %v492
    %494 = vdwg.mxu0
    %495 = vmatpush.msra.mxu0 0.0
    %496 = vmatpush.msra.mxu0 0.0
    %497 = vmatpush.msra.mxu0 0.0
    %498 = vmatpush.msra.mxu0 0.0
    %499 = vmatpush.msra.mxu0 0.0
    %500 = vmatpush.msra.mxu0 0.0
    %501 = vmatpush.msra.mxu0 0.0
    %502 = vmatpush.msra.mxu0 0.0
    %503 = vmatpush.msra.mxu0 0.0
    %504 = vmatpush.msra.mxu0 0.0
    %505 = vmatpush.msra.mxu0 0.0
    %506 = vmatpush.msra.mxu0 0.0
    %507 = vmatpush.msra.mxu0 0.0
    %508 = vmatpush.msra.mxu0 0.0
    %509 = vmatpush.msra.mxu0 0.0
    %510 = vmatpush.msra.mxu0 %v469
    %511 = vmatmul.f32.gmra.mxu0 %v473
    %v512 = vpop.f32.mrf.mxu0
    %v513 = vadd.f32 0.0, %v512
    %514 = vdwg.mxu0
    %v515 = vadd.f32 %v452, %v493
    %v516 = vadd.f32 %v453, %v513
    %517 = vrot.lane.b32.xlu0 %v30, 111
    %v518 = vpop.permute.xlu0 %517
    %519 = vrot.lane.b32.xlu0 %v31, 111
    %v520 = vpop.permute.xlu0 %519
    %vm521 = vcmp.lt.s32.totalorder %v37, 111
    %v522 = vsel %vm521, %v518, %v520
    %v523 = vsel %vm521, %v520, %v518
    %s524 = scalar_lea.vmem %s7, 16
    %v525 = vld [vmem:[%s524] sm:$0x3]
    %v527 = vperm.slane %v525, 0
    %v528 = vperm.slane %v525, 1
    %v531 = vmul.f32 %v522, %v527
    %v532 = vmul.f32 %v523, %v528
    %s533 = scalar_lea.vmem %s1, 64
    %v534 = vld [vmem:[%s533] sm:$0xff]
    %v536 = vsel %vm68, %v534, 0
    %538 = vmatpush.msra.mxu0 0.0
    %539 = vmatpush.msra.mxu0 0.0
    %540 = vmatpush.msra.mxu0 0.0
    %541 = vmatpush.msra.mxu0 0.0
    %542 = vmatpush.msra.mxu0 0.0
    %543 = vmatpush.msra.mxu0 0.0
    %544 = vmatpush.msra.mxu0 0.0
    %545 = vmatpush.msra.mxu0 0.0
    %546 = vmatpush.msra.mxu0 0.0
    %547 = vmatpush.msra.mxu0 0.0
    %548 = vmatpush.msra.mxu0 0.0
    %549 = vmatpush.msra.mxu0 0.0
    %550 = vmatpush.msra.mxu0 0.0
    %551 = vmatpush.msra.mxu0 0.0
    %552 = vmatpush.msra.mxu0 0.0
    %553 = vmatpush.msra.mxu0 %v531
    %554 = vmatmul.f32.gmra.mxu0 %v536
    %v555 = vpop.f32.mrf.mxu0
    %v556 = vadd.f32 0.0, %v555
    %557 = vdwg.mxu0
    %558 = vmatpush.msra.mxu0 0.0
    %559 = vmatpush.msra.mxu0 0.0
    %560 = vmatpush.msra.mxu0 0.0
    %561 = vmatpush.msra.mxu0 0.0
    %562 = vmatpush.msra.mxu0 0.0
    %563 = vmatpush.msra.mxu0 0.0
    %564 = vmatpush.msra.mxu0 0.0
    %565 = vmatpush.msra.mxu0 0.0
    %566 = vmatpush.msra.mxu0 0.0
    %567 = vmatpush.msra.mxu0 0.0
    %568 = vmatpush.msra.mxu0 0.0
    %569 = vmatpush.msra.mxu0 0.0
    %570 = vmatpush.msra.mxu0 0.0
    %571 = vmatpush.msra.mxu0 0.0
    %572 = vmatpush.msra.mxu0 0.0
    %573 = vmatpush.msra.mxu0 %v532
    %574 = vmatmul.f32.gmra.mxu0 %v536
    %v575 = vpop.f32.mrf.mxu0
    %v576 = vadd.f32 0.0, %v575
    %577 = vdwg.mxu0
    %v578 = vadd.f32 %v515, %v556
    %v579 = vadd.f32 %v516, %v576
    %v580 = vld [vmem:[%s3] sm:$0xff]
    %582 = vset.pattern.permute.xlu0 0
    %583 = vperm.xlu0 %582, %v580
    %v584 = vpop.permute.xlu0 %583
    %v586 = vmul.f32 %v578, %v584
    %v587 = vmul.f32 %v579, %v584
    %v588 = vld [vmem:[%s4] sm:$0xff]
    %590 = vset.pattern.permute.xlu0 0
    %591 = vperm.xlu0 %590, %v588
    %v592 = vpop.permute.xlu0 %591
    %v594 = vadd.f32 %v586, %v592
    %v595 = vadd.f32 %v587, %v592
    %v596 = vmax.f32 %v594, 0.0
    %v597 = vmax.f32 %v595, 0.0
    %598 = vrot.lane.b32.xlu0 %v596, 17
    %v599 = vpop.permute.xlu0 %598
    %600 = vrot.lane.b32.xlu0 %v597, 17
    %v601 = vpop.permute.xlu0 %600
    %v602 = vsel %vm38, %v599, %v601
    %v603 = vsel %vm38, %v601, %v599
    %v604 = vmul.f32 %v603, %v43
    %v605 = vmul.f32 %v602, %v44
    %v606 = vld [vmem:[%s2] sm:$0xff]
    %607 = vrot.lane.b32.xlu0 %v596, 16
    %v608 = vpop.permute.xlu0 %607
    %609 = vrot.lane.b32.xlu0 %v597, 16
    %v610 = vpop.permute.xlu0 %609
    %v611 = vsel %vm54, %v608, %v610
    %v612 = vsel %vm54, %v610, %v608
    %v613 = vmul.f32 %v612, %v60
    %v614 = vmul.f32 %v611, %v61
    %s615 = scalar_lea.vmem %s2, 8
    %v616 = vld [vmem:[%s615] sm:$0xff]
    %v618 = vsel %vm68, %v616, 0
    %620 = vmatpush.msra.mxu0 0.0
    %621 = vmatpush.msra.mxu0 0.0
    %622 = vmatpush.msra.mxu0 0.0
    %623 = vmatpush.msra.mxu0 0.0
    %624 = vmatpush.msra.mxu0 0.0
    %625 = vmatpush.msra.mxu0 0.0
    %626 = vmatpush.msra.mxu0 0.0
    %627 = vmatpush.msra.mxu0 0.0
    %628 = vmatpush.msra.mxu0 0.0
    %629 = vmatpush.msra.mxu0 0.0
    %630 = vmatpush.msra.mxu0 0.0
    %631 = vmatpush.msra.mxu0 0.0
    %632 = vmatpush.msra.mxu0 0.0
    %633 = vmatpush.msra.mxu0 0.0
    %634 = vmatpush.msra.mxu0 0.0
    %635 = vmatpush.msra.mxu0 %v613
    %636 = vmatmul.f32.gmra.mxu0 %v618
    %v637 = vpop.f32.mrf.mxu0
    %v638 = vadd.f32 0.0, %v637
    %639 = vdwg.mxu0
    %640 = vmatpush.msra.mxu0 0.0
    %641 = vmatpush.msra.mxu0 0.0
    %642 = vmatpush.msra.mxu0 0.0
    %643 = vmatpush.msra.mxu0 0.0
    %644 = vmatpush.msra.mxu0 0.0
    %645 = vmatpush.msra.mxu0 0.0
    %646 = vmatpush.msra.mxu0 0.0
    %647 = vmatpush.msra.mxu0 0.0
    %648 = vmatpush.msra.mxu0 0.0
    %649 = vmatpush.msra.mxu0 0.0
    %650 = vmatpush.msra.mxu0 0.0
    %651 = vmatpush.msra.mxu0 0.0
    %652 = vmatpush.msra.mxu0 0.0
    %653 = vmatpush.msra.mxu0 0.0
    %654 = vmatpush.msra.mxu0 0.0
    %655 = vmatpush.msra.mxu0 %v614
    %656 = vmatmul.f32.gmra.mxu0 %v618
    %v657 = vpop.f32.mrf.mxu0
    %v658 = vadd.f32 0.0, %v657
    %659 = vdwg.mxu0
    %v661 = vsel %vm68, %v606, 0
    %663 = vmatpush.msra.mxu0 0.0
    %664 = vmatpush.msra.mxu0 0.0
    %665 = vmatpush.msra.mxu0 0.0
    %666 = vmatpush.msra.mxu0 0.0
    %667 = vmatpush.msra.mxu0 0.0
    %668 = vmatpush.msra.mxu0 0.0
    %669 = vmatpush.msra.mxu0 0.0
    %670 = vmatpush.msra.mxu0 0.0
    %671 = vmatpush.msra.mxu0 0.0
    %672 = vmatpush.msra.mxu0 0.0
    %673 = vmatpush.msra.mxu0 0.0
    %674 = vmatpush.msra.mxu0 0.0
    %675 = vmatpush.msra.mxu0 0.0
    %676 = vmatpush.msra.mxu0 0.0
    %677 = vmatpush.msra.mxu0 0.0
    %678 = vmatpush.msra.mxu0 %v604
    %679 = vmatmul.f32.gmra.mxu0 %v661
    %v680 = vpop.f32.mrf.mxu0
    %v681 = vadd.f32 %v638, %v680
    %682 = vdwg.mxu0
    %683 = vmatpush.msra.mxu0 0.0
    %684 = vmatpush.msra.mxu0 0.0
    %685 = vmatpush.msra.mxu0 0.0
    %686 = vmatpush.msra.mxu0 0.0
    %687 = vmatpush.msra.mxu0 0.0
    %688 = vmatpush.msra.mxu0 0.0
    %689 = vmatpush.msra.mxu0 0.0
    %690 = vmatpush.msra.mxu0 0.0
    %691 = vmatpush.msra.mxu0 0.0
    %692 = vmatpush.msra.mxu0 0.0
    %693 = vmatpush.msra.mxu0 0.0
    %694 = vmatpush.msra.mxu0 0.0
    %695 = vmatpush.msra.mxu0 0.0
    %696 = vmatpush.msra.mxu0 0.0
    %697 = vmatpush.msra.mxu0 0.0
    %698 = vmatpush.msra.mxu0 %v605
    %699 = vmatmul.f32.gmra.mxu0 %v661
    %v700 = vpop.f32.mrf.mxu0
    %v701 = vadd.f32 %v658, %v700
    %702 = vdwg.mxu0
    %703 = vrot.lane.b32.xlu0 %v596, 15
    %v704 = vpop.permute.xlu0 %703
    %705 = vrot.lane.b32.xlu0 %v597, 15
    %v706 = vpop.permute.xlu0 %705
    %v707 = vsel %vm159, %v704, %v706
    %v708 = vsel %vm159, %v706, %v704
    %v709 = vmul.f32 %v708, %v165
    %v710 = vmul.f32 %v707, %v166
    %s711 = scalar_lea.vmem %s2, 16
    %v712 = vld [vmem:[%s711] sm:$0xff]
    %v714 = vsel %vm68, %v712, 0
    %716 = vmatpush.msra.mxu0 0.0
    %717 = vmatpush.msra.mxu0 0.0
    %718 = vmatpush.msra.mxu0 0.0
    %719 = vmatpush.msra.mxu0 0.0
    %720 = vmatpush.msra.mxu0 0.0
    %721 = vmatpush.msra.mxu0 0.0
    %722 = vmatpush.msra.mxu0 0.0
    %723 = vmatpush.msra.mxu0 0.0
    %724 = vmatpush.msra.mxu0 0.0
    %725 = vmatpush.msra.mxu0 0.0
    %726 = vmatpush.msra.mxu0 0.0
    %727 = vmatpush.msra.mxu0 0.0
    %728 = vmatpush.msra.mxu0 0.0
    %729 = vmatpush.msra.mxu0 0.0
    %730 = vmatpush.msra.mxu0 0.0
    %731 = vmatpush.msra.mxu0 %v709
    %732 = vmatmul.f32.gmra.mxu0 %v714
    %v733 = vpop.f32.mrf.mxu0
    %v734 = vadd.f32 0.0, %v733
    %735 = vdwg.mxu0
    %736 = vmatpush.msra.mxu0 0.0
    %737 = vmatpush.msra.mxu0 0.0
    %738 = vmatpush.msra.mxu0 0.0
    %739 = vmatpush.msra.mxu0 0.0
    %740 = vmatpush.msra.mxu0 0.0
    %741 = vmatpush.msra.mxu0 0.0
    %742 = vmatpush.msra.mxu0 0.0
    %743 = vmatpush.msra.mxu0 0.0
    %744 = vmatpush.msra.mxu0 0.0
    %745 = vmatpush.msra.mxu0 0.0
    %746 = vmatpush.msra.mxu0 0.0
    %747 = vmatpush.msra.mxu0 0.0
    %748 = vmatpush.msra.mxu0 0.0
    %749 = vmatpush.msra.mxu0 0.0
    %750 = vmatpush.msra.mxu0 0.0
    %751 = vmatpush.msra.mxu0 %v710
    %752 = vmatmul.f32.gmra.mxu0 %v714
    %v753 = vpop.f32.mrf.mxu0
    %v754 = vadd.f32 0.0, %v753
    %755 = vdwg.mxu0
    %v756 = vadd.f32 %v681, %v734
    %v757 = vadd.f32 %v701, %v754
    %758 = vrot.lane.b32.xlu0 %v596, 1
    %v759 = vpop.permute.xlu0 %758
    %760 = vrot.lane.b32.xlu0 %v597, 1
    %v761 = vpop.permute.xlu0 %760
    %v762 = vsel %vm222, %v759, %v761
    %v763 = vsel %vm222, %v761, %v759
    %v764 = vmul.f32 %v763, %v228
    %v765 = vmul.f32 %v762, %v229
    %s766 = scalar_lea.vmem %s2, 24
    %v767 = vld [vmem:[%s766] sm:$0xff]
    %v769 = vsel %vm68, %v767, 0
    %771 = vmatpush.msra.mxu0 0.0
    %772 = vmatpush.msra.mxu0 0.0
    %773 = vmatpush.msra.mxu0 0.0
    %774 = vmatpush.msra.mxu0 0.0
    %775 = vmatpush.msra.mxu0 0.0
    %776 = vmatpush.msra.mxu0 0.0
    %777 = vmatpush.msra.mxu0 0.0
    %778 = vmatpush.msra.mxu0 0.0
    %779 = vmatpush.msra.mxu0 0.0
    %780 = vmatpush.msra.mxu0 0.0
    %781 = vmatpush.msra.mxu0 0.0
    %782 = vmatpush.msra.mxu0 0.0
    %783 = vmatpush.msra.mxu0 0.0
    %784 = vmatpush.msra.mxu0 0.0
    %785 = vmatpush.msra.mxu0 0.0
    %786 = vmatpush.msra.mxu0 %v764
    %787 = vmatmul.f32.gmra.mxu0 %v769
    %v788 = vpop.f32.mrf.mxu0
    %v789 = vadd.f32 0.0, %v788
    %790 = vdwg.mxu0
    %791 = vmatpush.msra.mxu0 0.0
    %792 = vmatpush.msra.mxu0 0.0
    %793 = vmatpush.msra.mxu0 0.0
    %794 = vmatpush.msra.mxu0 0.0
    %795 = vmatpush.msra.mxu0 0.0
    %796 = vmatpush.msra.mxu0 0.0
    %797 = vmatpush.msra.mxu0 0.0
    %798 = vmatpush.msra.mxu0 0.0
    %799 = vmatpush.msra.mxu0 0.0
    %800 = vmatpush.msra.mxu0 0.0
    %801 = vmatpush.msra.mxu0 0.0
    %802 = vmatpush.msra.mxu0 0.0
    %803 = vmatpush.msra.mxu0 0.0
    %804 = vmatpush.msra.mxu0 0.0
    %805 = vmatpush.msra.mxu0 0.0
    %806 = vmatpush.msra.mxu0 %v765
    %807 = vmatmul.f32.gmra.mxu0 %v769
    %v808 = vpop.f32.mrf.mxu0
    %v809 = vadd.f32 0.0, %v808
    %810 = vdwg.mxu0
    %v811 = vadd.f32 %v756, %v789
    %v812 = vadd.f32 %v757, %v809
    %s813 = scalar_lea.vmem %s2, 32
    %v814 = vld [vmem:[%s813] sm:$0xff]
    %v816 = vsel %vm68, %v814, 0
    %818 = vmatpush.msra.mxu0 0.0
    %819 = vmatpush.msra.mxu0 0.0
    %820 = vmatpush.msra.mxu0 0.0
    %821 = vmatpush.msra.mxu0 0.0
    %822 = vmatpush.msra.mxu0 0.0
    %823 = vmatpush.msra.mxu0 0.0
    %824 = vmatpush.msra.mxu0 0.0
    %825 = vmatpush.msra.mxu0 0.0
    %826 = vmatpush.msra.mxu0 0.0
    %827 = vmatpush.msra.mxu0 0.0
    %828 = vmatpush.msra.mxu0 0.0
    %829 = vmatpush.msra.mxu0 0.0
    %830 = vmatpush.msra.mxu0 0.0
    %831 = vmatpush.msra.mxu0 0.0
    %832 = vmatpush.msra.mxu0 0.0
    %833 = vmatpush.msra.mxu0 %v596
    %834 = vmatmul.f32.gmra.mxu0 %v816
    %v835 = vpop.f32.mrf.mxu0
    %v836 = vadd.f32 0.0, %v835
    %837 = vdwg.mxu0
    %838 = vmatpush.msra.mxu0 0.0
    %839 = vmatpush.msra.mxu0 0.0
    %840 = vmatpush.msra.mxu0 0.0
    %841 = vmatpush.msra.mxu0 0.0
    %842 = vmatpush.msra.mxu0 0.0
    %843 = vmatpush.msra.mxu0 0.0
    %844 = vmatpush.msra.mxu0 0.0
    %845 = vmatpush.msra.mxu0 0.0
    %846 = vmatpush.msra.mxu0 0.0
    %847 = vmatpush.msra.mxu0 0.0
    %848 = vmatpush.msra.mxu0 0.0
    %849 = vmatpush.msra.mxu0 0.0
    %850 = vmatpush.msra.mxu0 0.0
    %851 = vmatpush.msra.mxu0 0.0
    %852 = vmatpush.msra.mxu0 0.0
    %853 = vmatpush.msra.mxu0 %v597
    %854 = vmatmul.f32.gmra.mxu0 %v816
    %v855 = vpop.f32.mrf.mxu0
    %v856 = vadd.f32 0.0, %v855
    %857 = vdwg.mxu0
    %v858 = vadd.f32 %v811, %v836
    %v859 = vadd.f32 %v812, %v856
    %860 = vrot.lane.b32.xlu0 %v596, 127
    %v861 = vpop.permute.xlu0 %860
    %862 = vrot.lane.b32.xlu0 %v597, 127
    %v863 = vpop.permute.xlu0 %862
    %v864 = vsel %vm332, %v861, %v863
    %v865 = vsel %vm332, %v863, %v861
    %v866 = vmul.f32 %v864, %v338
    %v867 = vmul.f32 %v865, %v339
    %s868 = scalar_lea.vmem %s2, 40
    %v869 = vld [vmem:[%s868] sm:$0xff]
    %v871 = vsel %vm68, %v869, 0
    %873 = vmatpush.msra.mxu0 0.0
    %874 = vmatpush.msra.mxu0 0.0
    %875 = vmatpush.msra.mxu0 0.0
    %876 = vmatpush.msra.mxu0 0.0
    %877 = vmatpush.msra.mxu0 0.0
    %878 = vmatpush.msra.mxu0 0.0
    %879 = vmatpush.msra.mxu0 0.0
    %880 = vmatpush.msra.mxu0 0.0
    %881 = vmatpush.msra.mxu0 0.0
    %882 = vmatpush.msra.mxu0 0.0
    %883 = vmatpush.msra.mxu0 0.0
    %884 = vmatpush.msra.mxu0 0.0
    %885 = vmatpush.msra.mxu0 0.0
    %886 = vmatpush.msra.mxu0 0.0
    %887 = vmatpush.msra.mxu0 0.0
    %888 = vmatpush.msra.mxu0 %v866
    %889 = vmatmul.f32.gmra.mxu0 %v871
    %v890 = vpop.f32.mrf.mxu0
    %v891 = vadd.f32 0.0, %v890
    %892 = vdwg.mxu0
    %893 = vmatpush.msra.mxu0 0.0
    %894 = vmatpush.msra.mxu0 0.0
    %895 = vmatpush.msra.mxu0 0.0
    %896 = vmatpush.msra.mxu0 0.0
    %897 = vmatpush.msra.mxu0 0.0
    %898 = vmatpush.msra.mxu0 0.0
    %899 = vmatpush.msra.mxu0 0.0
    %900 = vmatpush.msra.mxu0 0.0
    %901 = vmatpush.msra.mxu0 0.0
    %902 = vmatpush.msra.mxu0 0.0
    %903 = vmatpush.msra.mxu0 0.0
    %904 = vmatpush.msra.mxu0 0.0
    %905 = vmatpush.msra.mxu0 0.0
    %906 = vmatpush.msra.mxu0 0.0
    %907 = vmatpush.msra.mxu0 0.0
    %908 = vmatpush.msra.mxu0 %v867
    %909 = vmatmul.f32.gmra.mxu0 %v871
    %v910 = vpop.f32.mrf.mxu0
    %v911 = vadd.f32 0.0, %v910
    %912 = vdwg.mxu0
    %v913 = vadd.f32 %v858, %v891
    %v914 = vadd.f32 %v859, %v911
    %915 = vrot.lane.b32.xlu0 %v596, 113
    %v916 = vpop.permute.xlu0 %915
    %917 = vrot.lane.b32.xlu0 %v597, 113
    %v918 = vpop.permute.xlu0 %917
    %v919 = vsel %vm395, %v916, %v918
    %v920 = vsel %vm395, %v918, %v916
    %v921 = vmul.f32 %v919, %v401
    %v922 = vmul.f32 %v920, %v402
    %s923 = scalar_lea.vmem %s2, 48
    %v924 = vld [vmem:[%s923] sm:$0xff]
    %v926 = vsel %vm68, %v924, 0
    %928 = vmatpush.msra.mxu0 0.0
    %929 = vmatpush.msra.mxu0 0.0
    %930 = vmatpush.msra.mxu0 0.0
    %931 = vmatpush.msra.mxu0 0.0
    %932 = vmatpush.msra.mxu0 0.0
    %933 = vmatpush.msra.mxu0 0.0
    %934 = vmatpush.msra.mxu0 0.0
    %935 = vmatpush.msra.mxu0 0.0
    %936 = vmatpush.msra.mxu0 0.0
    %937 = vmatpush.msra.mxu0 0.0
    %938 = vmatpush.msra.mxu0 0.0
    %939 = vmatpush.msra.mxu0 0.0
    %940 = vmatpush.msra.mxu0 0.0
    %941 = vmatpush.msra.mxu0 0.0
    %942 = vmatpush.msra.mxu0 0.0
    %943 = vmatpush.msra.mxu0 %v921
    %944 = vmatmul.f32.gmra.mxu0 %v926
    %v945 = vpop.f32.mrf.mxu0
    %v946 = vadd.f32 0.0, %v945
    %947 = vdwg.mxu0
    %948 = vmatpush.msra.mxu0 0.0
    %949 = vmatpush.msra.mxu0 0.0
    %950 = vmatpush.msra.mxu0 0.0
    %951 = vmatpush.msra.mxu0 0.0
    %952 = vmatpush.msra.mxu0 0.0
    %953 = vmatpush.msra.mxu0 0.0
    %954 = vmatpush.msra.mxu0 0.0
    %955 = vmatpush.msra.mxu0 0.0
    %956 = vmatpush.msra.mxu0 0.0
    %957 = vmatpush.msra.mxu0 0.0
    %958 = vmatpush.msra.mxu0 0.0
    %959 = vmatpush.msra.mxu0 0.0
    %960 = vmatpush.msra.mxu0 0.0
    %961 = vmatpush.msra.mxu0 0.0
    %962 = vmatpush.msra.mxu0 0.0
    %963 = vmatpush.msra.mxu0 %v922
    %964 = vmatmul.f32.gmra.mxu0 %v926
    %v965 = vpop.f32.mrf.mxu0
    %v966 = vadd.f32 0.0, %v965
    %967 = vdwg.mxu0
    %v968 = vadd.f32 %v913, %v946
    %v969 = vadd.f32 %v914, %v966
    %970 = vrot.lane.b32.xlu0 %v596, 112
    %v971 = vpop.permute.xlu0 %970
    %972 = vrot.lane.b32.xlu0 %v597, 112
    %v973 = vpop.permute.xlu0 %972
    %v974 = vsel %vm458, %v971, %v973
    %v975 = vsel %vm458, %v973, %v971
    %v976 = vmul.f32 %v974, %v464
    %v977 = vmul.f32 %v975, %v465
    %s978 = scalar_lea.vmem %s2, 56
    %v979 = vld [vmem:[%s978] sm:$0xff]
    %v981 = vsel %vm68, %v979, 0
    %983 = vmatpush.msra.mxu0 0.0
    %984 = vmatpush.msra.mxu0 0.0
    %985 = vmatpush.msra.mxu0 0.0
    %986 = vmatpush.msra.mxu0 0.0
    %987 = vmatpush.msra.mxu0 0.0
    %988 = vmatpush.msra.mxu0 0.0
    %989 = vmatpush.msra.mxu0 0.0
    %990 = vmatpush.msra.mxu0 0.0
    %991 = vmatpush.msra.mxu0 0.0
    %992 = vmatpush.msra.mxu0 0.0
    %993 = vmatpush.msra.mxu0 0.0
    %994 = vmatpush.msra.mxu0 0.0
    %995 = vmatpush.msra.mxu0 0.0
    %996 = vmatpush.msra.mxu0 0.0
    %997 = vmatpush.msra.mxu0 0.0
    %998 = vmatpush.msra.mxu0 %v976
    %999 = vmatmul.f32.gmra.mxu0 %v981
    %v1000 = vpop.f32.mrf.mxu0
    %v1001 = vadd.f32 0.0, %v1000
    %1002 = vdwg.mxu0
    %1003 = vmatpush.msra.mxu0 0.0
    %1004 = vmatpush.msra.mxu0 0.0
    %1005 = vmatpush.msra.mxu0 0.0
    %1006 = vmatpush.msra.mxu0 0.0
    %1007 = vmatpush.msra.mxu0 0.0
    %1008 = vmatpush.msra.mxu0 0.0
    %1009 = vmatpush.msra.mxu0 0.0
    %1010 = vmatpush.msra.mxu0 0.0
    %1011 = vmatpush.msra.mxu0 0.0
    %1012 = vmatpush.msra.mxu0 0.0
    %1013 = vmatpush.msra.mxu0 0.0
    %1014 = vmatpush.msra.mxu0 0.0
    %1015 = vmatpush.msra.mxu0 0.0
    %1016 = vmatpush.msra.mxu0 0.0
    %1017 = vmatpush.msra.mxu0 0.0
    %1018 = vmatpush.msra.mxu0 %v977
    %1019 = vmatmul.f32.gmra.mxu0 %v981
    %v1020 = vpop.f32.mrf.mxu0
    %v1021 = vadd.f32 0.0, %v1020
    %1022 = vdwg.mxu0
    %v1023 = vadd.f32 %v968, %v1001
    %v1024 = vadd.f32 %v969, %v1021
    %1025 = vrot.lane.b32.xlu0 %v596, 111
    %v1026 = vpop.permute.xlu0 %1025
    %1027 = vrot.lane.b32.xlu0 %v597, 111
    %v1028 = vpop.permute.xlu0 %1027
    %v1029 = vsel %vm521, %v1026, %v1028
    %v1030 = vsel %vm521, %v1028, %v1026
    %v1031 = vmul.f32 %v1029, %v527
    %v1032 = vmul.f32 %v1030, %v528
    %s1033 = scalar_lea.vmem %s2, 64
    %v1034 = vld [vmem:[%s1033] sm:$0xff]
    %v1036 = vsel %vm68, %v1034, 0
    %1038 = vmatpush.msra.mxu0 0.0
    %1039 = vmatpush.msra.mxu0 0.0
    %1040 = vmatpush.msra.mxu0 0.0
    %1041 = vmatpush.msra.mxu0 0.0
    %1042 = vmatpush.msra.mxu0 0.0
    %1043 = vmatpush.msra.mxu0 0.0
    %1044 = vmatpush.msra.mxu0 0.0
    %1045 = vmatpush.msra.mxu0 0.0
    %1046 = vmatpush.msra.mxu0 0.0
    %1047 = vmatpush.msra.mxu0 0.0
    %1048 = vmatpush.msra.mxu0 0.0
    %1049 = vmatpush.msra.mxu0 0.0
    %1050 = vmatpush.msra.mxu0 0.0
    %1051 = vmatpush.msra.mxu0 0.0
    %1052 = vmatpush.msra.mxu0 0.0
    %1053 = vmatpush.msra.mxu0 %v1031
    %1054 = vmatmul.f32.gmra.mxu0 %v1036
    %v1055 = vpop.f32.mrf.mxu0
    %v1056 = vadd.f32 0.0, %v1055
    %1057 = vdwg.mxu0
    %1058 = vmatpush.msra.mxu0 0.0
    %1059 = vmatpush.msra.mxu0 0.0
    %1060 = vmatpush.msra.mxu0 0.0
    %1061 = vmatpush.msra.mxu0 0.0
    %1062 = vmatpush.msra.mxu0 0.0
    %1063 = vmatpush.msra.mxu0 0.0
    %1064 = vmatpush.msra.mxu0 0.0
    %1065 = vmatpush.msra.mxu0 0.0
    %1066 = vmatpush.msra.mxu0 0.0
    %1067 = vmatpush.msra.mxu0 0.0
    %1068 = vmatpush.msra.mxu0 0.0
    %1069 = vmatpush.msra.mxu0 0.0
    %1070 = vmatpush.msra.mxu0 0.0
    %1071 = vmatpush.msra.mxu0 0.0
    %1072 = vmatpush.msra.mxu0 0.0
    %1073 = vmatpush.msra.mxu0 %v1032
    %1074 = vmatmul.f32.gmra.mxu0 %v1036
    %v1075 = vpop.f32.mrf.mxu0
    %v1076 = vadd.f32 0.0, %v1075
    %1077 = vdwg.mxu0
    %v1078 = vadd.f32 %v1023, %v1056
    %v1079 = vadd.f32 %v1024, %v1076
    %v1080 = vld [vmem:[%s5] sm:$0xff]
    %1082 = vset.pattern.permute.xlu0 0
    %1083 = vperm.xlu0 %1082, %v1080
    %v1084 = vpop.permute.xlu0 %1083
    %v1086 = vmul.f32 %v1078, %v1084
    %v1087 = vmul.f32 %v1079, %v1084
    %v1088 = vld [vmem:[%s6] sm:$0xff]
    %1090 = vset.pattern.permute.xlu0 0
    %1091 = vperm.xlu0 %1090, %v1088
    %v1092 = vpop.permute.xlu0 %1091
    %v1094 = vadd.f32 %v1086, %v1092
    %v1095 = vadd.f32 %v1087, %v1092
    %v1096 = vadd.f32 %v1094, %v30
    %v1097 = vadd.f32 %v1095, %v31
    %v1098 = vmax.f32 %v1096, 0.0
    %v1099 = vmax.f32 %v1097, 0.0
    %1100 = vst [vmem:[#allocation2] sm:$0xff] %v1098
    %1101 = vst [vmem:[#allocation2 + $0x8] sm:$0xff] %v1099
    // Predicated region
    $region34: #{tpu_custom_call.1} parent=1 // pred_check
      _
    $region35: #{tpu_custom_call.1} parent=1 // pred_check_branch
      %1103 = sbr.rel (0) target = $region37
    $region36: #{tpu_custom_call.1} parent=1 // pred_region
      %1105 = vsyncadd [#allocation3], 0
      %s1107 = sshll.u32 [#allocation2], 4
      %s1108 = int_to_ptr.vmem [resolvable:$true] %s1107
      %s1109 = sshll.u32 %s8, 4
      %s1110 = int_to_ptr.hbm [resolvable:$true] %s1109
      %1112 = dma.vmem_to_hbm [thread:$0]  %s1108, 256, %s1110, [#allocation3]
    $region37: #{tpu_custom_call.1} parent=1 // pred_fallthru
      _
    // Predicated region
    $region38: #{tpu_custom_call.1} parent=1 // pred_check
      _
    $region39: #{tpu_custom_call.1} parent=1 // pred_check_branch
      %1114 = sbr.rel (0) target = $region41
    $region40: #{tpu_custom_call.1} parent=1 // pred_region
      %1116 = dma.done [#allocation3], 256
    $region41: #{tpu_custom_call.1} parent=1 // pred_fallthru
      _
    %1117 = vsyncpa [#allocation3], 1

</llo_original>
